<compile_context>
chip_gen: v5e
topology: v5e:2x2
jax: 0.10.0
libtpu: 0.0.40
codegen_flags: <defaults>
</compile_context>

<pallas_src>
import functools

import jax
import jax.numpy as jnp
from jax import lax
from jax.experimental import pallas as pl
from jax.experimental.pallas import tpu as pltpu

LANES = 128
SUBLANES = 8
ALIGN_ELEMS = SUBLANES * LANES      # 1024 = one f32 vreg worth of elements
TILE_ROWS_MAX = 8192                # (8192, 128) f32 = 4 MiB per input block


def _nmse_kernel(f_ref, d_ref, se_ref, norm_ref, *, valid_rows, need_mask):
    """Accumulates partial sums into resident (8, 128) f32 output blocks."""
    t = pl.program_id(0)

    @pl.when(t == 0)
    def _():
        se_ref[...] = jnp.zeros_like(se_ref)
        norm_ref[...] = jnp.zeros_like(norm_ref)

    tile_rows = f_ref.shape[0]

    def _accumulate(mask_rows):
        f = f_ref[...].astype(jnp.float32)
        d = d_ref[...].astype(jnp.float32)
        diff = f - d
        if mask_rows:
            # Only the (single) overhanging last tile pays for this.
            row_ids = t * tile_rows + lax.broadcasted_iota(
                jnp.int32, (tile_rows, LANES), 0)
            valid = row_ids < valid_rows
            f = jnp.where(valid, f, 0.0)
            diff = jnp.where(valid, diff, 0.0)
        # Tree-style partial reduction onto (8, 128) vreg-shaped accumulators:
        # pure elementwise VPU adds, no per-step cross-lane (XLU) reduction.
        se_ref[...] += jnp.sum(
            (diff * diff).reshape(-1, SUBLANES, LANES), axis=0)
        norm_ref[...] += jnp.sum(
            (f * f).reshape(-1, SUBLANES, LANES), axis=0)

    if need_mask:
        is_last = t == pl.num_programs(0) - 1

        @pl.when(jnp.logical_not(is_last))
        def _():
            _accumulate(mask_rows=False)

        @pl.when(is_last)
        def _():
            _accumulate(mask_rows=True)
    else:
        _accumulate(mask_rows=False)


@jax.jit
def _nmse_sums(float_tensor, dequantized_tensor):
    """Returns (loss, norm), both f32 scalars, computed entirely on-device."""
    f = float_tensor.reshape(-1)
    d = dequantized_tensor.reshape(-1)
    n = f.shape[0]

    # 1024-aligned prefix streamed by the kernel; < 1024-element tail in JAX.
    n_main = (n // ALIGN_ELEMS) * ALIGN_ELEMS

    se = jnp.float32(0.0)
    norm = jnp.float32(0.0)

    if n_main:
        rows = n_main // LANES              # always a multiple of 8
        f2 = f[:n_main].reshape(rows, LANES)
        d2 = d[:n_main].reshape(rows, LANES)

        tile_rows = min(TILE_ROWS_MAX, rows)
        num_tiles = pl.cdiv(rows, tile_rows)
        need_mask = (rows % tile_rows) != 0   # only the last tile overhangs

        kernel = functools.partial(
            _nmse_kernel, valid_rows=rows, need_mask=need_mask)

        se_blk, norm_blk = pl.pallas_call(
            kernel,
            out_shape=(
                jax.ShapeDtypeStruct((SUBLANES, LANES), jnp.float32),
                jax.ShapeDtypeStruct((SUBLANES, LANES), jnp.float32),
            ),
            grid_spec=pltpu.PrefetchScalarGridSpec(
                num_scalar_prefetch=0,
                grid=(num_tiles,),
                in_specs=[
                    pl.BlockSpec((tile_rows, LANES), lambda t: (t, 0)),
                    pl.BlockSpec((tile_rows, LANES), lambda t: (t, 0)),
                ],
                out_specs=[
                    pl.BlockSpec((SUBLANES, LANES), lambda t: (0, 0)),
                    pl.BlockSpec((SUBLANES, LANES), lambda t: (0, 0)),
                ],
            ),
            compiler_params=pltpu.CompilerParams(
                dimension_semantics=("arbitrary",),
                # 2 inputs x 2 pipeline buffers x 4 MiB = 16 MiB at max tile;
                # 40 MiB cap is legal on v5e/v6e/v7x and leaves headroom.
                vmem_limit_bytes=40 << 20,
            ),
        )(f2, d2)

        se = se + jnp.sum(se_blk)
        norm = norm + jnp.sum(norm_blk)

    if n_main != n:
        ft = f[n_main:].astype(jnp.float32)
        dt = d[n_main:].astype(jnp.float32)
        se = se + jnp.sum((ft - dt) ** 2)
        norm = norm + jnp.sum(ft * ft)

    loss = se / norm   # division stays fused on-device
    return loss, norm


def normalized_mse_loss(float_tensor, dequantized_tensor,
                        check_zero_norm=False):
    loss, norm = _nmse_sums(float_tensor, dequantized_tensor)
    if check_zero_norm:
        # TODO(synk): the module's eager zero-norm ValueError inherently needs
        # a blocking device->host readback (and would break under an outer
        # jax.jit), so it is opt-in; by default a zero norm yields inf/nan.
        if float(norm) == 0.0:
            raise ValueError(
                "The norm of the float tensor is zero. Cannot compute NMSE."
            )
    return loss


if __name__ == "__main__":
    key = jax.random.PRNGKey(0)
    k1, k2 = jax.random.split(key)

    def _ref(f, d):
        f32 = f.astype(jnp.float32)
        d32 = d.astype(jnp.float32)
        return jnp.sum((f32 - d32) ** 2) / jnp.sum(f32 ** 2)

    # 1) NCHW activations as in the PyTorch convolution tests (128-aligned).
    x_shape = (2, 4, 16, 16)
    float_tensor = jax.random.normal(k1, x_shape, dtype=jnp.float32)
    dequantized_tensor = float_tensor + 0.01 * jax.random.normal(
        k2, x_shape, dtype=jnp.float32)
    loss = normalized_mse_loss(float_tensor, dequantized_tensor)
    jax.block_until_ready(loss)
    assert jnp.allclose(loss, _ref(float_tensor, dequantized_tensor),
                        rtol=1e-5, atol=1e-7), loss

    # 2) Non-aligned shape: exercises the plain-JAX tail path (no pad copy).
    y_shape = (3, 5, 17, 19)
    yf = jax.random.normal(k1, y_shape, dtype=jnp.float32)
    yd = yf + 0.05 * jax.random.normal(k2, y_shape, dtype=jnp.float32)
    loss2 = normalized_mse_loss(yf, yd)
    jax.block_until_ready(loss2)
    assert jnp.allclose(loss2, _ref(yf, yd), rtol=1e-5, atol=1e-7), loss2

    # 3) Multi-tile shape with an overhanging (masked) last tile.
    z_shape = (4, 32, 96, 96)   # 1,179,648 elems -> 9216 rows -> 2 tiles
    zf = jax.random.normal(k1, z_shape, dtype=jnp.float32)
    zd = zf + 0.02 * jax.random.normal(k2, z_shape, dtype=jnp.float32)
    loss3 = normalized_mse_loss(zf, zd)
    jax.block_until_ready(loss3)
    assert jnp.allclose(loss3, _ref(zf, zd), rtol=1e-5, atol=1e-7), loss3

    print("KERNEL_OK")
</pallas_src>

<mosaic_0001>
module attributes {stable_mosaic.version = 11 : i64} {
  func.func @_nmse_kernel(%arg0: i32, %arg1: memref<16x128xf32, #tpu.memory_space<vmem>>, %arg2: memref<16x128xf32, #tpu.memory_space<vmem>>, %arg3: memref<8x128xf32, #tpu.memory_space<vmem>>, %arg4: memref<8x128xf32, #tpu.memory_space<vmem>>) attributes {dimension_semantics = [#tpu.dimension_semantics<arbitrary>], iteration_bounds = array<i64: 1>, scalar_prefetch = 0 : i64, scratch_operands = 0 : i64, tpu.core_type = #tpu.core_type<tc>, window_params = [{transform_indices = @transform_0, window_bounds = array<i64: 16, 128>}, {transform_indices = @transform_1, window_bounds = array<i64: 16, 128>}, {pipeline_mode = #tpu.pipeline_mode<synchronous>, transform_indices = @transform_2, window_bounds = array<i64: 8, 128>}, {pipeline_mode = #tpu.pipeline_mode<synchronous>, transform_indices = @transform_3, window_bounds = array<i64: 8, 128>}]} {
    %c0_i32 = arith.constant 0 : i32
    %0 = arith.cmpi eq, %arg0, %c0_i32 : i32
    %1 = arith.extui %0 : i1 to i32
    %c0_i32_0 = arith.constant 0 : i32
    %2 = arith.cmpi ne, %1, %c0_i32_0 : i32
    scf.if %2 {
      %cst_13 = arith.constant 0.000000e+00 : f32
      %18 = vector.broadcast %cst_13 : f32 to vector<8x128xf32>
      %c0_14 = arith.constant 0 : index
      %c0_15 = arith.constant 0 : index
      %19 = vector.load %arg3[%c0_14, %c0_15] : memref<8x128xf32, #tpu.memory_space<vmem>>, vector<8x128xf32>
      tpu.vector_store %arg3[%c0_14, %c0_15], %18 {strides = array<i32>} : memref<8x128xf32, #tpu.memory_space<vmem>>, vector<8x128xf32>,
      %cst_16 = arith.constant 0.000000e+00 : f32
      %20 = vector.broadcast %cst_16 : f32 to vector<8x128xf32>
      %c0_17 = arith.constant 0 : index
      %c0_18 = arith.constant 0 : index
      %21 = vector.load %arg4[%c0_17, %c0_18] : memref<8x128xf32, #tpu.memory_space<vmem>>, vector<8x128xf32>
      tpu.vector_store %arg4[%c0_17, %c0_18], %20 {strides = array<i32>} : memref<8x128xf32, #tpu.memory_space<vmem>>, vector<8x128xf32>,
    } else {
    }
    %c0 = arith.constant 0 : index
    %c0_1 = arith.constant 0 : index
    %3 = vector.load %arg1[%c0, %c0_1] : memref<16x128xf32, #tpu.memory_space<vmem>>, vector<16x128xf32>
    %c0_2 = arith.constant 0 : index
    %c0_3 = arith.constant 0 : index
    %4 = vector.load %arg2[%c0_2, %c0_3] : memref<16x128xf32, #tpu.memory_space<vmem>>, vector<16x128xf32>
    %5 = arith.subf %3, %4 : vector<16x128xf32>
    %c0_4 = arith.constant 0 : index
    %c0_5 = arith.constant 0 : index
    %6 = vector.load %arg3[%c0_4, %c0_5] : memref<8x128xf32, #tpu.memory_space<vmem>>, vector<8x128xf32>
    %7 = arith.mulf %5, %5 : vector<16x128xf32>
    %8 = vector.shape_cast %7 : vector<16x128xf32> to vector<2x8x128xf32>
    %cst = arith.constant dense<0.000000e+00> : vector<8x128xf32>
    %9 = vector.multi_reduction <add>, %8, %cst [0] : vector<2x8x128xf32> to vector<8x128xf32>
    %10 = arith.addf %6, %9 : vector<8x128xf32>
    %c0_6 = arith.constant 0 : index
    %c0_7 = arith.constant 0 : index
    %11 = vector.load %arg3[%c0_6, %c0_7] : memref<8x128xf32, #tpu.memory_space<vmem>>, vector<8x128xf32>
    tpu.vector_store %arg3[%c0_6, %c0_7], %10 {strides = array<i32>} : memref<8x128xf32, #tpu.memory_space<vmem>>, vector<8x128xf32>,
    %c0_8 = arith.constant 0 : index
    %c0_9 = arith.constant 0 : index
    %12 = vector.load %arg4[%c0_8, %c0_9] : memref<8x128xf32, #tpu.memory_space<vmem>>, vector<8x128xf32>
    %13 = arith.mulf %3, %3 : vector<16x128xf32>
    %14 = vector.shape_cast %13 : vector<16x128xf32> to vector<2x8x128xf32>
    %cst_10 = arith.constant dense<0.000000e+00> : vector<8x128xf32>
    %15 = vector.multi_reduction <add>, %14, %cst_10 [0] : vector<2x8x128xf32> to vector<8x128xf32>
    %16 = arith.addf %12, %15 : vector<8x128xf32>
    %c0_11 = arith.constant 0 : index
    %c0_12 = arith.constant 0 : index
    %17 = vector.load %arg4[%c0_11, %c0_12] : memref<8x128xf32, #tpu.memory_space<vmem>>, vector<8x128xf32>
    tpu.vector_store %arg4[%c0_11, %c0_12], %16 {strides = array<i32>} : memref<8x128xf32, #tpu.memory_space<vmem>>, vector<8x128xf32>,
    return
  }
  func.func @transform_0(%arg0: i32) -> (i32, i32) {
    %c0_i32 = arith.constant 0 : i32
    %c0_i32_0 = arith.constant 0 : i32
    return %arg0, %c0_i32 : i32, i32
  }
  func.func @transform_1(%arg0: i32) -> (i32, i32) {
    %c0_i32 = arith.constant 0 : i32
    %c0_i32_0 = arith.constant 0 : i32
    return %arg0, %c0_i32 : i32, i32
  }
  func.func @transform_2(%arg0: i32) -> (i32, i32) {
    %c0_i32 = arith.constant 0 : i32
    %c0_i32_0 = arith.constant 0 : i32
    %c0_i32_1 = arith.constant 0 : i32
    return %c0_i32, %c0_i32_0 : i32, i32
  }
  func.func @transform_3(%arg0: i32) -> (i32, i32) {
    %c0_i32 = arith.constant 0 : i32
    %c0_i32_0 = arith.constant 0 : i32
    %c0_i32_1 = arith.constant 0 : i32
    return %c0_i32, %c0_i32_0 : i32, i32
  }
}

</mosaic_0001>

<llo_original>
// kernel: _nmse_sums.1
$region0: #{_nmse_sums.1}
  #allocation0 [shape = 'u32[]', space=smem, size = 0x4, offset = 0x4, fixed_abs, tag = 'smem constant byte address 0x4 - core index']
  #allocation1 [shape = 'u32[72,128]{1,0:T(1,128)}', space=vmem, size = 0x9000, scoped, tag = 'internal scratch']
  %s0 = inlined_call_operand.vmem [shape: f32[16,128], index: 0, kind: input, shape index: {}]
  %s1 = inlined_call_operand.vmem [shape: f32[16,128], index: 1, kind: input, shape index: {}]
  %s2 = inlined_call_operand.vmem [shape: f32[8,128], index: 2, kind: output, shape index: {0}]
  %s3 = inlined_call_operand.vmem [shape: f32[8,128], index: 3, kind: output, shape index: {1}]
  %4 = xla_tuple %s2, %s3
  %s5 = sld [smem:[#allocation0]]
  $region30: #{_nmse_sums.1} parent=0
    _
  %s7 = ssub.s32 1, %s5
  %s8 = scalar_select 0, %s7, %s5
  // Predicated region
  $region2: #{_nmse_sums.1} parent=0 // pred_check
    _
  $region3: #{_nmse_sums.1} parent=0 // pred_check_branch
    %10 = sbr.rel (0) target = $region5
  $region4: #{_nmse_sums.1} parent=0 // pred_region
    _
  $region5: #{_nmse_sums.1} parent=0 // pred_fallthru
    _
  // Predicated region
  $region6: #{_nmse_sums.1} parent=0 // pred_check
    _
  $region7: #{_nmse_sums.1} parent=0 // pred_check_branch
    %12 = sbr.rel (0) target = $region9
  $region8: #{_nmse_sums.1} parent=0 // pred_region
    _
  $region9: #{_nmse_sums.1} parent=0 // pred_fallthru
    _
  %p13 = scmp.eq.s32.totalorder 0, 0
  // Predicated region
  $region10: #{_nmse_sums.1} parent=0 // pred_check
    %p14 = pneg %p13
  $region11: #{_nmse_sums.1} parent=0 // pred_check_branch
    %16 = sbr.rel (%p14) target = $region13
  $region12: #{_nmse_sums.1} parent=0 // pred_region
    %17 = vst [vmem:[%s2] sm:$0xff] 0.0
    %18 = vst [vmem:[%s3] sm:$0xff] 0.0
  $region13: #{_nmse_sums.1} parent=0 // pred_fallthru
    _
  %v19 = vld [vmem:[%s0] sm:$0xff]
  %v20 = vld [vmem:[%s0 + $0x8] sm:$0xff]
  %v21 = vld [vmem:[%s1] sm:$0xff]
  %v22 = vld [vmem:[%s1 + $0x8] sm:$0xff]
  %v23 = vsub.f32 %v19, %v21
  %v24 = vsub.f32 %v20, %v22
  %v25 = vld [vmem:[%s2] sm:$0xff]
  %v26 = vmul.f32 %v23, %v23
  %v27 = vmul.f32 %v24, %v24
  %v28 = vadd.f32 %v26, %v27
  %v29 = vadd.f32 %v25, %v28
  %30 = vst [vmem:[%s2] sm:$0xff] %v29
  %v31 = vld [vmem:[%s3] sm:$0xff]
  %v32 = vmul.f32 %v19, %v19
  %v33 = vmul.f32 %v20, %v20
  %v34 = vadd.f32 %v32, %v33
  %v35 = vadd.f32 %v31, %v34
  %36 = vst [vmem:[%s3] sm:$0xff] %v35
  // Predicated region
  $region14: #{_nmse_sums.1} parent=0 // pred_check
    _
  $region15: #{_nmse_sums.1} parent=0 // pred_check_branch
    %38 = sbr.rel (0) target = $region17
  $region16: #{_nmse_sums.1} parent=0 // pred_region
    _
  $region17: #{_nmse_sums.1} parent=0 // pred_fallthru
    _
  // Predicated region
  $region18: #{_nmse_sums.1} parent=0 // pred_check
    _
  $region19: #{_nmse_sums.1} parent=0 // pred_check_branch
    %40 = sbr.rel (0) target = $region21
  $region20: #{_nmse_sums.1} parent=0 // pred_region
    _
  $region21: #{_nmse_sums.1} parent=0 // pred_fallthru
    _
  // Predicated region
  $region22: #{_nmse_sums.1} parent=0 // pred_check
    _
  $region23: #{_nmse_sums.1} parent=0 // pred_check_branch
    %42 = sbr.rel (0) target = $region25
  $region24: #{_nmse_sums.1} parent=0 // pred_region
    _
  $region25: #{_nmse_sums.1} parent=0 // pred_fallthru
    _
  // Predicated region
  $region26: #{_nmse_sums.1} parent=0 // pred_check
    _
  $region27: #{_nmse_sums.1} parent=0 // pred_check_branch
    %44 = sbr.rel (0) target = $region29
  $region28: #{_nmse_sums.1} parent=0 // pred_region
    _
  $region29: #{_nmse_sums.1} parent=0 // pred_fallthru
    _

</llo_original>
